<compile_context>
chip_gen: v7x
topology: tpu7x:2x2x1
jax: 0.10.0
libtpu: 0.0.40
codegen_flags: <defaults>
</compile_context>

<pallas_src>
import jax
import jax.numpy as jnp
from jax.experimental import pallas as pl
from jax.experimental.pallas import tpu as pltpu


def critic_kernel(x_ref, t_ref,
                  w1x_ref, w1t_ref, b1_ref,
                  w2_ref, b2_ref,
                  w3_ref, b3_ref,
                  w4_ref, b4_ref,
                  w5_ref, b5_ref,
                  out_ref):
    """Fused MLP forward for one batch tile of TB rows."""
    x = x_ref[...]                      # (TB, i_dim)
    t = t_ref[...]                      # (TB, 1)
    mxu_dtype = w2_ref.dtype            # bf16 weights -> bf16 MXU operands, f32 acc

    # Layer 1: fused "concat" -> x @ W1[:i_dim] + t * W1[i_dim:] + b1, then ReLU.
    h = jnp.dot(x.astype(mxu_dtype), w1x_ref[...],
                preferred_element_type=jnp.float32)
    h = h + t.astype(jnp.float32) * w1t_ref[...].astype(jnp.float32)
    h = jnp.maximum(h + b1_ref[...].astype(jnp.float32), 0.0)

    # Layers 2-4: Linear + ReLU (f32 accumulation, f32 elementwise).
    for w_ref, b_ref in ((w2_ref, b2_ref), (w3_ref, b3_ref), (w4_ref, b4_ref)):
        h = jnp.dot(h.astype(mxu_dtype), w_ref[...],
                    preferred_element_type=jnp.float32)
        h = jnp.maximum(h + b_ref[...].astype(jnp.float32), 0.0)

    # Output layer (h_dim -> 1), no activation.
    y = jnp.dot(h.astype(mxu_dtype), w5_ref[...],
                preferred_element_type=jnp.float32)
    y = y + b5_ref[...].astype(jnp.float32)            # (TB, 1)

    # Lane-dense store: relayout (TB, 1) -> (1, 1, TB). XLU is idle here.
    out_ref[...] = y.reshape(out_ref.shape).astype(out_ref.dtype)


def critic_forward(x, t, params, *, block_rows=512):
    """x: (B, i_dim), t: (B, 1). Returns (B,) (scalar if B == 1), like torch .squeeze()."""
    B, i_dim = x.shape
    (w1, b1, w2, b2, w3, b3, w4, b4, w5, b5) = params

    # Split layer-1 weight at trace time so the kernel consumes x and t directly.
    w1x = w1[:i_dim, :]                 # (i_dim, h_dim)
    w1t = w1[i_dim:, :]                 # (1, h_dim)

    # Pick a batch tile: multiple of 8 sublanes, single tile for small B.
    if B <= block_rows:
        tb = max(8, ((B + 7) // 8) * 8)
    else:
        tb = block_rows
    b_pad = ((B + tb - 1) // tb) * tb
    if b_pad != B:
        x = jnp.pad(x, ((0, b_pad - B), (0, 0)))
        t = jnp.pad(t, ((0, b_pad - B), (0, 0)))
    g = b_pad // tb

    # Weights / biases: full-array blocks, constant index map -> DMA'd once.
    def const_spec(a):
        return pl.BlockSpec(a.shape, lambda i: (0,) * a.ndim)

    out = pl.pallas_call(
        critic_kernel,
        out_shape=jax.ShapeDtypeStruct((g, 1, tb), jnp.float32),
        grid=(g,),
        in_specs=[
            pl.BlockSpec((tb, i_dim), lambda i: (i, 0)),   # x tile (streamed)
            pl.BlockSpec((tb, 1), lambda i: (i, 0)),       # t tile (streamed)
            const_spec(w1x), const_spec(w1t), const_spec(b1),
            const_spec(w2), const_spec(b2),
            const_spec(w3), const_spec(b3),
            const_spec(w4), const_spec(b4),
            const_spec(w5), const_spec(b5),
        ],
        out_specs=pl.BlockSpec((1, 1, tb), lambda i: (i, 0, 0)),
        compiler_params=pltpu.CompilerParams(
            dimension_semantics=("parallel",)),   # lets v7x shard tiles across both TCs
    )(x, t, w1x, w1t, b1, w2, b2, w3, b3, w4, b4, w5, b5)

    y = out.reshape(b_pad)[:B]
    return jnp.squeeze(y)


def init_params(key, i_dim, h_dim, dtype=jnp.float32):
    """Deterministic init. Weights stored as (in, out); biases as (1, out)."""
    dims = [(i_dim + 1, h_dim), (h_dim, h_dim), (h_dim, h_dim),
            (h_dim, h_dim), (h_dim, 1)]
    params = []
    for (fan_in, fan_out) in dims:
        key, kw, kb = jax.random.split(key, 3)
        bound = 1.0 / jnp.sqrt(fan_in)  # mimic torch Linear default init range
        w = jax.random.uniform(kw, (fan_in, fan_out), jnp.float32, -bound, bound)
        b = jax.random.uniform(kb, (1, fan_out), jnp.float32, -bound, bound)
        params += [w.astype(dtype), b.astype(dtype)]
    return tuple(params)


def critic_reference(x, t, params):
    """Pure-JAX reference for correctness check (f32)."""
    (w1, b1, w2, b2, w3, b3, w4, b4, w5, b5) = [p.astype(jnp.float32) for p in params]
    h = jnp.concatenate((x, t), axis=1)
    for (w, b) in [(w1, b1), (w2, b2), (w3, b3), (w4, b4)]:
        h = jnp.maximum(h @ w + b, 0.0)
    return jnp.squeeze(h @ w5 + b5)


if __name__ == "__main__":
    i_dim, h_dim = 4, 32
    key = jax.random.PRNGKey(0)
    key, kp = jax.random.split(key)
    params = init_params(kp, i_dim, h_dim)

    # --- Small batch (matches the module's toy usage) -----------------------
    B = 8
    key, kx, kt = jax.random.split(key, 3)
    x = jax.random.normal(kx, (B, i_dim), jnp.float32)
    t = jax.random.normal(kt, (B, 1), jnp.float32)

    out = jax.block_until_ready(critic_forward(x, t, params))
    ref = critic_reference(x, t, params)
    assert out.shape == (B,), out.shape
    assert jnp.allclose(out, ref, atol=1e-5, rtol=1e-5), (out, ref)

    # --- Larger batch: exercises multi-tile grid + padding path -------------
    B2 = 2000
    key, kx2, kt2 = jax.random.split(key, 3)
    x2 = jax.random.normal(kx2, (B2, i_dim), jnp.float32)
    t2 = jax.random.normal(kt2, (B2, 1), jnp.float32)

    out2 = jax.block_until_ready(critic_forward(x2, t2, params, block_rows=512))
    ref2 = critic_reference(x2, t2, params)
    assert out2.shape == (B2,), out2.shape
    assert jnp.allclose(out2, ref2, atol=1e-4, rtol=1e-4), "large-batch mismatch"

    print("KERNEL_OK")
</pallas_src>

<mosaic_0001>
module attributes {stable_mosaic.version = 11 : i64} {
  func.func @critic_kernel(%arg0: i32, %arg1: memref<8x4xf32, #tpu.memory_space<vmem>>, %arg2: memref<8x1xf32, #tpu.memory_space<vmem>>, %arg3: memref<4x32xf32, #tpu.memory_space<vmem>>, %arg4: memref<1x32xf32, #tpu.memory_space<vmem>>, %arg5: memref<1x32xf32, #tpu.memory_space<vmem>>, %arg6: memref<32x32xf32, #tpu.memory_space<vmem>>, %arg7: memref<1x32xf32, #tpu.memory_space<vmem>>, %arg8: memref<32x32xf32, #tpu.memory_space<vmem>>, %arg9: memref<1x32xf32, #tpu.memory_space<vmem>>, %arg10: memref<32x32xf32, #tpu.memory_space<vmem>>, %arg11: memref<1x32xf32, #tpu.memory_space<vmem>>, %arg12: memref<32x1xf32, #tpu.memory_space<vmem>>, %arg13: memref<1x1xf32, #tpu.memory_space<vmem>>, %arg14: memref<1x1x8xf32, #tpu.memory_space<vmem>>) attributes {dimension_semantics = [#tpu.dimension_semantics<parallel>], iteration_bounds = array<i64: 1>, scalar_prefetch = 0 : i64, scratch_operands = 0 : i64, tpu.core_type = #tpu.core_type<tc>, window_params = [{transform_indices = @transform_0, window_bounds = array<i64: 8, 4>}, {transform_indices = @transform_1, window_bounds = array<i64: 8, 1>}, {pipeline_mode = #tpu.pipeline_mode<synchronous>, transform_indices = @transform_2, window_bounds = array<i64: 4, 32>}, {pipeline_mode = #tpu.pipeline_mode<synchronous>, transform_indices = @transform_3, window_bounds = array<i64: 1, 32>}, {pipeline_mode = #tpu.pipeline_mode<synchronous>, transform_indices = @transform_4, window_bounds = array<i64: 1, 32>}, {pipeline_mode = #tpu.pipeline_mode<synchronous>, transform_indices = @transform_5, window_bounds = array<i64: 32, 32>}, {pipeline_mode = #tpu.pipeline_mode<synchronous>, transform_indices = @transform_6, window_bounds = array<i64: 1, 32>}, {pipeline_mode = #tpu.pipeline_mode<synchronous>, transform_indices = @transform_7, window_bounds = array<i64: 32, 32>}, {pipeline_mode = #tpu.pipeline_mode<synchronous>, transform_indices = @transform_8, window_bounds = array<i64: 1, 32>}, {pipeline_mode = #tpu.pipeline_mode<synchronous>, transform_indices = @transform_9, window_bounds = array<i64: 32, 32>}, {pipeline_mode = #tpu.pipeline_mode<synchronous>, transform_indices = @transform_10, window_bounds = array<i64: 1, 32>}, {pipeline_mode = #tpu.pipeline_mode<synchronous>, transform_indices = @transform_11, window_bounds = array<i64: 32, 1>}, {pipeline_mode = #tpu.pipeline_mode<synchronous>, transform_indices = @transform_12, window_bounds = array<i64: 1, 1>}, {transform_indices = @transform_13, window_bounds = array<i64: 1, 1, 8>}]} {
    %c0 = arith.constant 0 : index
    %c0_0 = arith.constant 0 : index
    %0 = vector.load %arg1[%c0, %c0_0] : memref<8x4xf32, #tpu.memory_space<vmem>>, vector<8x4xf32>
    %c0_1 = arith.constant 0 : index
    %c0_2 = arith.constant 0 : index
    %1 = vector.load %arg2[%c0_1, %c0_2] : memref<8x1xf32, #tpu.memory_space<vmem>>, vector<8x1xf32>
    %c0_3 = arith.constant 0 : index
    %c0_4 = arith.constant 0 : index
    %2 = vector.load %arg3[%c0_3, %c0_4] : memref<4x32xf32, #tpu.memory_space<vmem>>, vector<4x32xf32>
    %cst = arith.constant dense<0.000000e+00> : vector<8x32xf32>
    %3 = tpu.matmul %0, %2, %cst {dimension_numbers = #tpu.dot_dimension_numbers<[1], [0], [0], [1], [0, 0, 1, 1], [], []>} : vector<8x4xf32>, vector<4x32xf32>, vector<8x32xf32> -> vector<8x32xf32>
    %c0_5 = arith.constant 0 : index
    %c0_6 = arith.constant 0 : index
    %4 = vector.load %arg4[%c0_5, %c0_6] : memref<1x32xf32, #tpu.memory_space<vmem>>, vector<1x32xf32>
    %5 = vector.broadcast %1 : vector<8x1xf32> to vector<8x32xf32>
    %6 = vector.broadcast %4 : vector<1x32xf32> to vector<8x32xf32>
    %7 = arith.mulf %5, %6 : vector<8x32xf32>
    %8 = arith.addf %3, %7 : vector<8x32xf32>
    %c0_7 = arith.constant 0 : index
    %c0_8 = arith.constant 0 : index
    %9 = vector.load %arg5[%c0_7, %c0_8] : memref<1x32xf32, #tpu.memory_space<vmem>>, vector<1x32xf32>
    %10 = vector.broadcast %9 : vector<1x32xf32> to vector<8x32xf32>
    %11 = arith.addf %8, %10 : vector<8x32xf32>
    %cst_9 = arith.constant 0.000000e+00 : f32
    %12 = vector.broadcast %cst_9 : f32 to vector<8x32xf32>
    %13 = arith.maximumf %11, %12 : vector<8x32xf32>
    %c0_10 = arith.constant 0 : index
    %c0_11 = arith.constant 0 : index
    %14 = vector.load %arg6[%c0_10, %c0_11] : memref<32x32xf32, #tpu.memory_space<vmem>>, vector<32x32xf32>
    %cst_12 = arith.constant dense<0.000000e+00> : vector<8x32xf32>
    %15 = tpu.matmul %13, %14, %cst_12 {dimension_numbers = #tpu.dot_dimension_numbers<[1], [0], [0], [1], [0, 0, 1, 1], [], []>} : vector<8x32xf32>, vector<32x32xf32>, vector<8x32xf32> -> vector<8x32xf32>
    %c0_13 = arith.constant 0 : index
    %c0_14 = arith.constant 0 : index
    %16 = vector.load %arg7[%c0_13, %c0_14] : memref<1x32xf32, #tpu.memory_space<vmem>>, vector<1x32xf32>
    %17 = vector.broadcast %16 : vector<1x32xf32> to vector<8x32xf32>
    %18 = arith.addf %15, %17 : vector<8x32xf32>
    %cst_15 = arith.constant 0.000000e+00 : f32
    %19 = vector.broadcast %cst_15 : f32 to vector<8x32xf32>
    %20 = arith.maximumf %18, %19 : vector<8x32xf32>
    %c0_16 = arith.constant 0 : index
    %c0_17 = arith.constant 0 : index
    %21 = vector.load %arg8[%c0_16, %c0_17] : memref<32x32xf32, #tpu.memory_space<vmem>>, vector<32x32xf32>
    %cst_18 = arith.constant dense<0.000000e+00> : vector<8x32xf32>
    %22 = tpu.matmul %20, %21, %cst_18 {dimension_numbers = #tpu.dot_dimension_numbers<[1], [0], [0], [1], [0, 0, 1, 1], [], []>} : vector<8x32xf32>, vector<32x32xf32>, vector<8x32xf32> -> vector<8x32xf32>
    %c0_19 = arith.constant 0 : index
    %c0_20 = arith.constant 0 : index
    %23 = vector.load %arg9[%c0_19, %c0_20] : memref<1x32xf32, #tpu.memory_space<vmem>>, vector<1x32xf32>
    %24 = vector.broadcast %23 : vector<1x32xf32> to vector<8x32xf32>
    %25 = arith.addf %22, %24 : vector<8x32xf32>
    %cst_21 = arith.constant 0.000000e+00 : f32
    %26 = vector.broadcast %cst_21 : f32 to vector<8x32xf32>
    %27 = arith.maximumf %25, %26 : vector<8x32xf32>
    %c0_22 = arith.constant 0 : index
    %c0_23 = arith.constant 0 : index
    %28 = vector.load %arg10[%c0_22, %c0_23] : memref<32x32xf32, #tpu.memory_space<vmem>>, vector<32x32xf32>
    %cst_24 = arith.constant dense<0.000000e+00> : vector<8x32xf32>
    %29 = tpu.matmul %27, %28, %cst_24 {dimension_numbers = #tpu.dot_dimension_numbers<[1], [0], [0], [1], [0, 0, 1, 1], [], []>} : vector<8x32xf32>, vector<32x32xf32>, vector<8x32xf32> -> vector<8x32xf32>
    %c0_25 = arith.constant 0 : index
    %c0_26 = arith.constant 0 : index
    %30 = vector.load %arg11[%c0_25, %c0_26] : memref<1x32xf32, #tpu.memory_space<vmem>>, vector<1x32xf32>
    %31 = vector.broadcast %30 : vector<1x32xf32> to vector<8x32xf32>
    %32 = arith.addf %29, %31 : vector<8x32xf32>
    %cst_27 = arith.constant 0.000000e+00 : f32
    %33 = vector.broadcast %cst_27 : f32 to vector<8x32xf32>
    %34 = arith.maximumf %32, %33 : vector<8x32xf32>
    %c0_28 = arith.constant 0 : index
    %c0_29 = arith.constant 0 : index
    %35 = vector.load %arg12[%c0_28, %c0_29] : memref<32x1xf32, #tpu.memory_space<vmem>>, vector<32x1xf32>
    %cst_30 = arith.constant dense<0.000000e+00> : vector<8x1xf32>
    %36 = tpu.matmul %34, %35, %cst_30 {dimension_numbers = #tpu.dot_dimension_numbers<[1], [0], [0], [1], [0, 0, 1, 1], [], []>} : vector<8x32xf32>, vector<32x1xf32>, vector<8x1xf32> -> vector<8x1xf32>
    %c0_31 = arith.constant 0 : index
    %c0_32 = arith.constant 0 : index
    %37 = vector.load %arg13[%c0_31, %c0_32] : memref<1x1xf32, #tpu.memory_space<vmem>>, vector<1x1xf32>
    %38 = vector.broadcast %37 : vector<1x1xf32> to vector<8x1xf32>
    %39 = arith.addf %36, %38 : vector<8x1xf32>
    %40 = vector.shape_cast %39 : vector<8x1xf32> to vector<1x1x8xf32>
    %c0_33 = arith.constant 0 : index
    %c0_34 = arith.constant 0 : index
    %c0_35 = arith.constant 0 : index
    %41 = vector.load %arg14[%c0_33, %c0_34, %c0_35] : memref<1x1x8xf32, #tpu.memory_space<vmem>>, vector<1x1x8xf32>
    tpu.vector_store %arg14[%c0_33, %c0_34, %c0_35], %40 {strides = array<i32>} : memref<1x1x8xf32, #tpu.memory_space<vmem>>, vector<1x1x8xf32>,
    return
  }
  func.func @transform_0(%arg0: i32) -> (i32, i32) {
    %c0_i32 = arith.constant 0 : i32
    %c0_i32_0 = arith.constant 0 : i32
    return %arg0, %c0_i32 : i32, i32
  }
  func.func @transform_1(%arg0: i32) -> (i32, i32) {
    %c0_i32 = arith.constant 0 : i32
    %c0_i32_0 = arith.constant 0 : i32
    return %arg0, %c0_i32 : i32, i32
  }
  func.func @transform_2(%arg0: i32) -> (i32, i32) {
    %c0_i32 = arith.constant 0 : i32
    %c0_i32_0 = arith.constant 0 : i32
    %c0_i32_1 = arith.constant 0 : i32
    return %c0_i32, %c0_i32_0 : i32, i32
  }
  func.func @transform_3(%arg0: i32) -> (i32, i32) {
    %c0_i32 = arith.constant 0 : i32
    %c0_i32_0 = arith.constant 0 : i32
    %c0_i32_1 = arith.constant 0 : i32
    return %c0_i32, %c0_i32_0 : i32, i32
  }
  func.func @transform_4(%arg0: i32) -> (i32, i32) {
    %c0_i32 = arith.constant 0 : i32
    %c0_i32_0 = arith.constant 0 : i32
    %c0_i32_1 = arith.constant 0 : i32
    return %c0_i32, %c0_i32_0 : i32, i32
  }
  func.func @transform_5(%arg0: i32) -> (i32, i32) {
    %c0_i32 = arith.constant 0 : i32
    %c0_i32_0 = arith.constant 0 : i32
    %c0_i32_1 = arith.constant 0 : i32
    return %c0_i32, %c0_i32_0 : i32, i32
  }
  func.func @transform_6(%arg0: i32) -> (i32, i32) {
    %c0_i32 = arith.constant 0 : i32
    %c0_i32_0 = arith.constant 0 : i32
    %c0_i32_1 = arith.constant 0 : i32
    return %c0_i32, %c0_i32_0 : i32, i32
  }
  func.func @transform_7(%arg0: i32) -> (i32, i32) {
    %c0_i32 = arith.constant 0 : i32
    %c0_i32_0 = arith.constant 0 : i32
    %c0_i32_1 = arith.constant 0 : i32
    return %c0_i32, %c0_i32_0 : i32, i32
  }
  func.func @transform_8(%arg0: i32) -> (i32, i32) {
    %c0_i32 = arith.constant 0 : i32
    %c0_i32_0 = arith.constant 0 : i32
    %c0_i32_1 = arith.constant 0 : i32
    return %c0_i32, %c0_i32_0 : i32, i32
  }
  func.func @transform_9(%arg0: i32) -> (i32, i32) {
    %c0_i32 = arith.constant 0 : i32
    %c0_i32_0 = arith.constant 0 : i32
    %c0_i32_1 = arith.constant 0 : i32
    return %c0_i32, %c0_i32_0 : i32, i32
  }
  func.func @transform_10(%arg0: i32) -> (i32, i32) {
    %c0_i32 = arith.constant 0 : i32
    %c0_i32_0 = arith.constant 0 : i32
    %c0_i32_1 = arith.constant 0 : i32
    return %c0_i32, %c0_i32_0 : i32, i32
  }
  func.func @transform_11(%arg0: i32) -> (i32, i32) {
    %c0_i32 = arith.constant 0 : i32
    %c0_i32_0 = arith.constant 0 : i32
    %c0_i32_1 = arith.constant 0 : i32
    return %c0_i32, %c0_i32_0 : i32, i32
  }
  func.func @transform_12(%arg0: i32) -> (i32, i32) {
    %c0_i32 = arith.constant 0 : i32
    %c0_i32_0 = arith.constant 0 : i32
    %c0_i32_1 = arith.constant 0 : i32
    return %c0_i32, %c0_i32_0 : i32, i32
  }
  func.func @transform_13(%arg0: i32) -> (i32, i32, i32) {
    %c0_i32 = arith.constant 0 : i32
    %c0_i32_0 = arith.constant 0 : i32
    %c0_i32_1 = arith.constant 0 : i32
    return %arg0, %c0_i32, %c0_i32_0 : i32, i32, i32
  }
}

</mosaic_0001>

<llo_original>
// kernel: tpu_custom_call.1
$region0: #{tpu_custom_call.1}
  #allocation0 [shape = 'u32[]', space=smem, size = 0x4, offset = 0x4, fixed_abs, tag = 'smem constant byte address 0x4 - core index']
  #allocation1 [shape = 'u32[144,128]{1,0:T(1,128)}', space=vmem, size = 0x12000, scoped, tag = 'internal scratch']
  #allocation2 [shape = 'f32[1,1]{1,0:T(1,128)S(1)}', space=vmem, size = 0x200, scoped, tag = 'scoped memory for tpu_custom_call.1']
  %s0 = inlined_call_operand.vmem [shape: f32[8,4], index: 0, kind: input, shape index: {}]
  %s1 = inlined_call_operand.vmem [shape: f32[8,1], index: 1, kind: input, shape index: {}]
  %s2 = inlined_call_operand.hbm [shape: f32[4,32], index: 2, kind: input, shape index: {}]
  %s3 = inlined_call_operand.vmem [shape: f32[1,32], index: 3, kind: input, shape index: {}]
  %s4 = inlined_call_operand.vmem [shape: f32[1,32], index: 4, kind: input, shape index: {}]
  %s5 = inlined_call_operand.vmem [shape: f32[32,32], index: 5, kind: input, shape index: {}]
  %s6 = inlined_call_operand.vmem [shape: f32[1,32], index: 6, kind: input, shape index: {}]
  %s7 = inlined_call_operand.vmem [shape: f32[32,32], index: 7, kind: input, shape index: {}]
  %s8 = inlined_call_operand.vmem [shape: f32[1,32], index: 8, kind: input, shape index: {}]
  %s9 = inlined_call_operand.hbm [shape: f32[32,32], index: 9, kind: input, shape index: {}]
  %s10 = inlined_call_operand.vmem [shape: f32[1,32], index: 10, kind: input, shape index: {}]
  %s11 = inlined_call_operand.vmem [shape: f32[32,1], index: 11, kind: input, shape index: {}]
  %s12 = inlined_call_operand.<no memory space> [shape: f32[1,1], index: 12, kind: input, shape index: {}]
  %s13 = inlined_call_operand.hbm [shape: f32[1,1,8], index: 13, kind: output, shape index: {}]
  %s14 = sld [smem:[#allocation0]]
  $region70: #{tpu_custom_call.1} parent=0
    _
  %s16 = ssub.s32 1, %s14
  %s17 = scalar_select 0, %s16, %s14
  %v18 = vstv %s12
  %19 = vst [vmem:[#allocation2] sm:$0x1] %v18
  $region1: #{tpu_custom_call.1} parent=0
    #allocation3 [shape = 'u8[2048]{0}', space=vmem, size = 0x800, scoped, tag = 'input window, operand 2, single buffered']
    #allocation4 [shape = 's32[1]{0}', space=sflag, size = 0x4, scoped, tag = 'scoped memory for tpu_custom_call.1']
    #allocation5 [shape = 's32[1]{0}', space=sflag, size = 0x4, scoped, tag = 'scoped memory for tpu_custom_call.1']
    #allocation6 [shape = 'u8[16384]{0}', space=vmem, size = 0x4000, scoped, tag = 'input window, operand 9, single buffered']
    #allocation7 [shape = 's32[1]{0}', space=sflag, size = 0x4, scoped, tag = 'scoped memory for tpu_custom_call.1']
    #allocation8 [shape = 'u8[512]{0}', space=vmem, size = 0x400, scoped, tag = 'output window, operand 0, single buffered']
    %20 = vsyncpa [#allocation4], 0
    %21 = vsyncpa [#allocation7], 0
    %22 = vsyncpa [#allocation5], 0
    // Predicated region
    $region2: #{tpu_custom_call.1} parent=1 // pred_check
      _
    $region3: #{tpu_custom_call.1} parent=1 // pred_check_branch
      %24 = sbr.rel (0) target = $region5
    $region4: #{tpu_custom_call.1} parent=1 // pred_region
      _
    $region5: #{tpu_custom_call.1} parent=1 // pred_fallthru
      _
    // Predicated region
    $region6: #{tpu_custom_call.1} parent=1 // pred_check
      _
    $region7: #{tpu_custom_call.1} parent=1 // pred_check_branch
      %26 = sbr.rel (0) target = $region9
    $region8: #{tpu_custom_call.1} parent=1 // pred_region
      _
    $region9: #{tpu_custom_call.1} parent=1 // pred_fallthru
      _
    // Predicated region
    $region10: #{tpu_custom_call.1} parent=1 // pred_check
      _
    $region11: #{tpu_custom_call.1} parent=1 // pred_check_branch
      %28 = sbr.rel (0) target = $region13
    $region12: #{tpu_custom_call.1} parent=1 // pred_region
      %s30 = ssub.s32 64, 64
      %31 = vsyncadd [#allocation4], %s30
      %s33 = sshll.u32 [#allocation3], 4
      %s34 = int_to_ptr.vmem [resolvable:$true] %s33
      %36 = dma.hbm_to_vmem [thread:$0]  %s2, 64, %s34, [#allocation4]
    $region13: #{tpu_custom_call.1} parent=1 // pred_fallthru
      _
    // Predicated region
    $region14: #{tpu_custom_call.1} parent=1 // pred_check
      _
    $region15: #{tpu_custom_call.1} parent=1 // pred_check_branch
      %38 = sbr.rel (0) target = $region17
    $region16: #{tpu_custom_call.1} parent=1 // pred_region
      _
    $region17: #{tpu_custom_call.1} parent=1 // pred_fallthru
      _
    // Predicated region
    $region18: #{tpu_custom_call.1} parent=1 // pred_check
      _
    $region19: #{tpu_custom_call.1} parent=1 // pred_check_branch
      %40 = sbr.rel (0) target = $region21
    $region20: #{tpu_custom_call.1} parent=1 // pred_region
      _
    $region21: #{tpu_custom_call.1} parent=1 // pred_fallthru
      _
    // Predicated region
    $region22: #{tpu_custom_call.1} parent=1 // pred_check
      _
    $region23: #{tpu_custom_call.1} parent=1 // pred_check_branch
      %42 = sbr.rel (0) target = $region25
    $region24: #{tpu_custom_call.1} parent=1 // pred_region
      _
    $region25: #{tpu_custom_call.1} parent=1 // pred_fallthru
      _
    // Predicated region
    $region26: #{tpu_custom_call.1} parent=1 // pred_check
      _
    $region27: #{tpu_custom_call.1} parent=1 // pred_check_branch
      %44 = sbr.rel (0) target = $region29
    $region28: #{tpu_custom_call.1} parent=1 // pred_region
      _
    $region29: #{tpu_custom_call.1} parent=1 // pred_fallthru
      _
    // Predicated region
    $region30: #{tpu_custom_call.1} parent=1 // pred_check
      _
    $region31: #{tpu_custom_call.1} parent=1 // pred_check_branch
      %46 = sbr.rel (0) target = $region33
    $region32: #{tpu_custom_call.1} parent=1 // pred_region
      _
    $region33: #{tpu_custom_call.1} parent=1 // pred_fallthru
      _
    // Predicated region
    $region34: #{tpu_custom_call.1} parent=1 // pred_check
      _
    $region35: #{tpu_custom_call.1} parent=1 // pred_check_branch
      %48 = sbr.rel (0) target = $region37
    $region36: #{tpu_custom_call.1} parent=1 // pred_region
      _
    $region37: #{tpu_custom_call.1} parent=1 // pred_fallthru
      _
    // Predicated region
    $region38: #{tpu_custom_call.1} parent=1 // pred_check
      _
    $region39: #{tpu_custom_call.1} parent=1 // pred_check_branch
      %50 = sbr.rel (0) target = $region41
    $region40: #{tpu_custom_call.1} parent=1 // pred_region
      %s52 = ssub.s32 512, 512
      %53 = vsyncadd [#allocation7], %s52
      %s54 = sshll.u32 [#allocation6], 4
      %s55 = int_to_ptr.vmem [resolvable:$true] %s54
      %60 = dma.hbm_to_vmem [thread:$0]  %s9, 512, %s55, [#allocation7], 128, 128, 8
    $region41: #{tpu_custom_call.1} parent=1 // pred_fallthru
      _
    // Predicated region
    $region42: #{tpu_custom_call.1} parent=1 // pred_check
      _
    $region43: #{tpu_custom_call.1} parent=1 // pred_check_branch
      %62 = sbr.rel (0) target = $region45
    $region44: #{tpu_custom_call.1} parent=1 // pred_region
      _
    $region45: #{tpu_custom_call.1} parent=1 // pred_fallthru
      _
    // Predicated region
    $region46: #{tpu_custom_call.1} parent=1 // pred_check
      _
    $region47: #{tpu_custom_call.1} parent=1 // pred_check_branch
      %64 = sbr.rel (0) target = $region49
    $region48: #{tpu_custom_call.1} parent=1 // pred_region
      _
    $region49: #{tpu_custom_call.1} parent=1 // pred_fallthru
      _
    // Predicated region
    $region50: #{tpu_custom_call.1} parent=1 // pred_check
      _
    $region51: #{tpu_custom_call.1} parent=1 // pred_check_branch
      %66 = sbr.rel (0) target = $region53
    $region52: #{tpu_custom_call.1} parent=1 // pred_region
      _
    $region53: #{tpu_custom_call.1} parent=1 // pred_fallthru
      _
    // Predicated region
    $region54: #{tpu_custom_call.1} parent=1 // pred_check
      _
    $region55: #{tpu_custom_call.1} parent=1 // pred_check_branch
      %68 = sbr.rel (0) target = $region57
    $region56: #{tpu_custom_call.1} parent=1 // pred_region
      %69 = dma.done [#allocation4], 64
    $region57: #{tpu_custom_call.1} parent=1 // pred_fallthru
      _
    // Predicated region
    $region58: #{tpu_custom_call.1} parent=1 // pred_check
      _
    $region59: #{tpu_custom_call.1} parent=1 // pred_check_branch
      %71 = sbr.rel (0) target = $region61
    $region60: #{tpu_custom_call.1} parent=1 // pred_region
      %72 = dma.done [#allocation7], 512
    $region61: #{tpu_custom_call.1} parent=1 // pred_fallthru
      _
    %v73 = vld [vmem:[%s0] sm:$0xff]
    %v74 = vld [vmem:[%s1] sm:$0xff]
    %v75 = vld [vmem:[#allocation3] sm:$0xf]
    %v76 = vld [vmem:[%s3] sm:$0x1]
    %78 = vset.pattern.permute.xlu0 0
    %79 = vperm.xlu0 %78, %v74
    %v80 = vpop.permute.xlu0 %79
    %v83 = vlaneseq
    %v84 = vshrl.u32 %v83, 7
    %v85 = vsub.s32 0, %v84
    %v86 = vrot.slane %v76, %v85
    %v88 = vmul.f32 %v80, %v86
    %vm89 = vcmask 31744
    %v91 = vsel %vm89, %v73, 0
    %vm93 = vcmask 1043456
    %v95 = vsel %vm93, %v75, 0
    %97 = vmatprep.subr.mxu0 0.0
    %98 = vmatpush1.msra.mxu0 %v95
    %99 = vmatprep.subr.mxu0 0.0
    %100 = vmatpush1.msra.mxu0 0.0
    %101 = vmatprep.subr.mxu0 0.0
    %102 = vmatpush1.msra.mxu0 0.0
    %103 = vmatprep.subr.mxu0 0.0
    %104 = vmatpush1.msra.mxu0 0.0
    %105 = vmatprep.subr.mxu0 0.0
    %106 = vmatpush1.msra.mxu0 0.0
    %107 = vmatprep.subr.mxu0 0.0
    %108 = vmatpush1.msra.mxu0 0.0
    %109 = vmatprep.subr.mxu0 0.0
    %110 = vmatpush1.msra.mxu0 0.0
    %111 = vmatprep.subr.mxu0 0.0
    %112 = vmatpush1.msra.mxu0 0.0
    %113 = vmatprep.subr.mxu0 0.0
    %114 = vmatpush1.msra.mxu0 0.0
    %115 = vmatprep.subr.mxu0 0.0
    %116 = vmatpush1.msra.mxu0 0.0
    %117 = vmatprep.subr.mxu0 0.0
    %118 = vmatpush1.msra.mxu0 0.0
    %119 = vmatprep.subr.mxu0 0.0
    %120 = vmatpush1.msra.mxu0 0.0
    %121 = vmatprep.subr.mxu0 0.0
    %122 = vmatpush1.msra.mxu0 0.0
    %123 = vmatprep.subr.mxu0 0.0
    %124 = vmatpush1.msra.mxu0 0.0
    %125 = vmatprep.subr.mxu0 0.0
    %126 = vmatpush1.msra.mxu0 0.0
    %127 = vmatprep.subr.mxu0 0.0
    %128 = vmatpush1.msra.mxu0 0.0
    %129 = vmatprep.subr.mxu0 0.0
    %130 = vmatpush1.msra.mxu0 0.0
    %131 = vmatprep.subr.mxu0 0.0
    %132 = vmatpush1.msra.mxu0 0.0
    %133 = vmatprep.subr.mxu0 0.0
    %134 = vmatpush1.msra.mxu0 0.0
    %135 = vmatprep.subr.mxu0 0.0
    %136 = vmatpush1.msra.mxu0 0.0
    %137 = vmatprep.subr.mxu0 0.0
    %138 = vmatpush1.msra.mxu0 0.0
    %139 = vmatprep.subr.mxu0 0.0
    %140 = vmatpush1.msra.mxu0 0.0
    %141 = vmatprep.subr.mxu0 0.0
    %142 = vmatpush1.msra.mxu0 0.0
    %143 = vmatprep.subr.mxu0 0.0
    %144 = vmatpush1.msra.mxu0 0.0
    %145 = vmatprep.subr.mxu0 0.0
    %146 = vmatpush1.msra.mxu0 0.0
    %147 = vmatprep.subr.mxu0 0.0
    %148 = vmatpush1.msra.mxu0 0.0
    %149 = vmatprep.subr.mxu0 0.0
    %150 = vmatpush1.msra.mxu0 0.0
    %151 = vmatprep.subr.mxu0 0.0
    %152 = vmatpush1.msra.mxu0 0.0
    %153 = vmatprep.subr.mxu0 0.0
    %154 = vmatpush1.msra.mxu0 0.0
    %155 = vmatprep.subr.mxu0 0.0
    %156 = vmatpush1.msra.mxu0 0.0
    %157 = vmatprep.subr.mxu0 0.0
    %158 = vmatpush1.msra.mxu0 0.0
    %159 = vmatprep.subr.mxu0 0.0
    %160 = vmatpush1.msra.mxu0 0.0
    %161 = vmatprep.mubr.f32.mxu0 0.0
    %162 = vmatmul.mubr.f32.gmra.mrb[0].mxu0 %v91
    %v163 = vpop.f32.mrb[0].mxu0
    %v164 = vadd.f32 %v88, %v163
    %v165 = vpop.f32.mrb[0].mxu0
    %166 = vdwg.mxu0
    %v167 = vld [vmem:[%s4] sm:$0x1]
    %v169 = vlaneseq
    %v170 = vshrl.u32 %v169, 7
    %v171 = vsub.s32 0, %v170
    %v172 = vrot.slane %v167, %v171
    %v174 = vadd.f32 %v164, %v172
    %v175 = vmax.f32 %v174, 0.0
    %v176 = vld [vmem:[%s5] sm:$0xff]
    %v177 = vld [vmem:[%s5 + $0x8] sm:$0xff]
    %v178 = vld [vmem:[%s5 + $0x10] sm:$0xff]
    %v179 = vld [vmem:[%s5 + $0x18] sm:$0xff]
    %v180 = vld [vmem:[%s6] sm:$0x1]
    %v182 = vlaneseq
    %v183 = vshrl.u32 %v182, 7
    %v184 = vsub.s32 0, %v183
    %v185 = vrot.slane %v180, %v184
    %vm187 = vcmask 261120
    %v189 = vsel %vm187, %v175, 0
    %191 = vmatprep.subr.mxu0 0.0
    %192 = vmatpush1.msra.mxu0 %v176
    %193 = vmatprep.subr.mxu0 0.0
    %194 = vmatpush1.msra.mxu0 %v177
    %195 = vmatprep.subr.mxu0 0.0
    %196 = vmatpush1.msra.mxu0 %v178
    %197 = vmatprep.subr.mxu0 0.0
    %198 = vmatpush1.msra.mxu0 %v179
    %199 = vmatprep.subr.mxu0 0.0
    %200 = vmatpush1.msra.mxu0 0.0
    %201 = vmatprep.subr.mxu0 0.0
    %202 = vmatpush1.msra.mxu0 0.0
    %203 = vmatprep.subr.mxu0 0.0
    %204 = vmatpush1.msra.mxu0 0.0
    %205 = vmatprep.subr.mxu0 0.0
    %206 = vmatpush1.msra.mxu0 0.0
    %207 = vmatprep.subr.mxu0 0.0
    %208 = vmatpush1.msra.mxu0 0.0
    %209 = vmatprep.subr.mxu0 0.0
    %210 = vmatpush1.msra.mxu0 0.0
    %211 = vmatprep.subr.mxu0 0.0
    %212 = vmatpush1.msra.mxu0 0.0
    %213 = vmatprep.subr.mxu0 0.0
    %214 = vmatpush1.msra.mxu0 0.0
    %215 = vmatprep.subr.mxu0 0.0
    %216 = vmatpush1.msra.mxu0 0.0
    %217 = vmatprep.subr.mxu0 0.0
    %218 = vmatpush1.msra.mxu0 0.0
    %219 = vmatprep.subr.mxu0 0.0
    %220 = vmatpush1.msra.mxu0 0.0
    %221 = vmatprep.subr.mxu0 0.0
    %222 = vmatpush1.msra.mxu0 0.0
    %223 = vmatprep.subr.mxu0 0.0
    %224 = vmatpush1.msra.mxu0 0.0
    %225 = vmatprep.subr.mxu0 0.0
    %226 = vmatpush1.msra.mxu0 0.0
    %227 = vmatprep.subr.mxu0 0.0
    %228 = vmatpush1.msra.mxu0 0.0
    %229 = vmatprep.subr.mxu0 0.0
    %230 = vmatpush1.msra.mxu0 0.0
    %231 = vmatprep.subr.mxu0 0.0
    %232 = vmatpush1.msra.mxu0 0.0
    %233 = vmatprep.subr.mxu0 0.0
    %234 = vmatpush1.msra.mxu0 0.0
    %235 = vmatprep.subr.mxu0 0.0
    %236 = vmatpush1.msra.mxu0 0.0
    %237 = vmatprep.subr.mxu0 0.0
    %238 = vmatpush1.msra.mxu0 0.0
    %239 = vmatprep.subr.mxu0 0.0
    %240 = vmatpush1.msra.mxu0 0.0
    %241 = vmatprep.subr.mxu0 0.0
    %242 = vmatpush1.msra.mxu0 0.0
    %243 = vmatprep.subr.mxu0 0.0
    %244 = vmatpush1.msra.mxu0 0.0
    %245 = vmatprep.subr.mxu0 0.0
    %246 = vmatpush1.msra.mxu0 0.0
    %247 = vmatprep.subr.mxu0 0.0
    %248 = vmatpush1.msra.mxu0 0.0
    %249 = vmatprep.subr.mxu0 0.0
    %250 = vmatpush1.msra.mxu0 0.0
    %251 = vmatprep.subr.mxu0 0.0
    %252 = vmatpush1.msra.mxu0 0.0
    %253 = vmatprep.subr.mxu0 0.0
    %254 = vmatpush1.msra.mxu0 0.0
    %255 = vmatprep.mubr.f32.mxu0 0.0
    %256 = vmatmul.mubr.f32.gmra.mrb[0].mxu0 %v189
    %v257 = vpop.f32.mrb[0].mxu0
    %v258 = vadd.f32 %v185, %v257
    %v259 = vpop.f32.mrb[0].mxu0
    %260 = vdwg.mxu0
    %v261 = vmax.f32 %v258, 0.0
    %v262 = vld [vmem:[%s7] sm:$0xff]
    %v263 = vld [vmem:[%s7 + $0x8] sm:$0xff]
    %v264 = vld [vmem:[%s7 + $0x10] sm:$0xff]
    %v265 = vld [vmem:[%s7 + $0x18] sm:$0xff]
    %v266 = vld [vmem:[%s8] sm:$0x1]
    %v268 = vlaneseq
    %v269 = vshrl.u32 %v268, 7
    %v270 = vsub.s32 0, %v269
    %v271 = vrot.slane %v266, %v270
    %v274 = vsel %vm187, %v261, 0
    %276 = vmatprep.subr.mxu0 0.0
    %277 = vmatpush1.msra.mxu0 %v262
    %278 = vmatprep.subr.mxu0 0.0
    %279 = vmatpush1.msra.mxu0 %v263
    %280 = vmatprep.subr.mxu0 0.0
    %281 = vmatpush1.msra.mxu0 %v264
    %282 = vmatprep.subr.mxu0 0.0
    %283 = vmatpush1.msra.mxu0 %v265
    %284 = vmatprep.subr.mxu0 0.0
    %285 = vmatpush1.msra.mxu0 0.0
    %286 = vmatprep.subr.mxu0 0.0
    %287 = vmatpush1.msra.mxu0 0.0
    %288 = vmatprep.subr.mxu0 0.0
    %289 = vmatpush1.msra.mxu0 0.0
    %290 = vmatprep.subr.mxu0 0.0
    %291 = vmatpush1.msra.mxu0 0.0
    %292 = vmatprep.subr.mxu0 0.0
    %293 = vmatpush1.msra.mxu0 0.0
    %294 = vmatprep.subr.mxu0 0.0
    %295 = vmatpush1.msra.mxu0 0.0
    %296 = vmatprep.subr.mxu0 0.0
    %297 = vmatpush1.msra.mxu0 0.0
    %298 = vmatprep.subr.mxu0 0.0
    %299 = vmatpush1.msra.mxu0 0.0
    %300 = vmatprep.subr.mxu0 0.0
    %301 = vmatpush1.msra.mxu0 0.0
    %302 = vmatprep.subr.mxu0 0.0
    %303 = vmatpush1.msra.mxu0 0.0
    %304 = vmatprep.subr.mxu0 0.0
    %305 = vmatpush1.msra.mxu0 0.0
    %306 = vmatprep.subr.mxu0 0.0
    %307 = vmatpush1.msra.mxu0 0.0
    %308 = vmatprep.subr.mxu0 0.0
    %309 = vmatpush1.msra.mxu0 0.0
    %310 = vmatprep.subr.mxu0 0.0
    %311 = vmatpush1.msra.mxu0 0.0
    %312 = vmatprep.subr.mxu0 0.0
    %313 = vmatpush1.msra.mxu0 0.0
    %314 = vmatprep.subr.mxu0 0.0
    %315 = vmatpush1.msra.mxu0 0.0
    %316 = vmatprep.subr.mxu0 0.0
    %317 = vmatpush1.msra.mxu0 0.0
    %318 = vmatprep.subr.mxu0 0.0
    %319 = vmatpush1.msra.mxu0 0.0
    %320 = vmatprep.subr.mxu0 0.0
    %321 = vmatpush1.msra.mxu0 0.0
    %322 = vmatprep.subr.mxu0 0.0
    %323 = vmatpush1.msra.mxu0 0.0
    %324 = vmatprep.subr.mxu0 0.0
    %325 = vmatpush1.msra.mxu0 0.0
    %326 = vmatprep.subr.mxu0 0.0
    %327 = vmatpush1.msra.mxu0 0.0
    %328 = vmatprep.subr.mxu0 0.0
    %329 = vmatpush1.msra.mxu0 0.0
    %330 = vmatprep.subr.mxu0 0.0
    %331 = vmatpush1.msra.mxu0 0.0
    %332 = vmatprep.subr.mxu0 0.0
    %333 = vmatpush1.msra.mxu0 0.0
    %334 = vmatprep.subr.mxu0 0.0
    %335 = vmatpush1.msra.mxu0 0.0
    %336 = vmatprep.subr.mxu0 0.0
    %337 = vmatpush1.msra.mxu0 0.0
    %338 = vmatprep.subr.mxu0 0.0
    %339 = vmatpush1.msra.mxu0 0.0
    %340 = vmatprep.mubr.f32.mxu0 0.0
    %341 = vmatmul.mubr.f32.gmra.mrb[0].mxu0 %v274
    %v342 = vpop.f32.mrb[0].mxu0
    %v343 = vadd.f32 %v271, %v342
    %v344 = vpop.f32.mrb[0].mxu0
    %345 = vdwg.mxu0
    %v346 = vmax.f32 %v343, 0.0
    %v347 = vld [vmem:[#allocation6] sm:$0xff]
    %v348 = vld [vmem:[#allocation6 + $0x8] sm:$0xff]
    %v349 = vld [vmem:[#allocation6 + $0x10] sm:$0xff]
    %v350 = vld [vmem:[#allocation6 + $0x18] sm:$0xff]
    %v351 = vld [vmem:[%s10] sm:$0x1]
    %v353 = vlaneseq
    %v354 = vshrl.u32 %v353, 7
    %v355 = vsub.s32 0, %v354
    %v356 = vrot.slane %v351, %v355
    %v359 = vsel %vm187, %v346, 0
    %361 = vmatprep.subr.mxu0 0.0
    %362 = vmatpush1.msra.mxu0 %v347
    %363 = vmatprep.subr.mxu0 0.0
    %364 = vmatpush1.msra.mxu0 %v348
    %365 = vmatprep.subr.mxu0 0.0
    %366 = vmatpush1.msra.mxu0 %v349
    %367 = vmatprep.subr.mxu0 0.0
    %368 = vmatpush1.msra.mxu0 %v350
    %369 = vmatprep.subr.mxu0 0.0
    %370 = vmatpush1.msra.mxu0 0.0
    %371 = vmatprep.subr.mxu0 0.0
    %372 = vmatpush1.msra.mxu0 0.0
    %373 = vmatprep.subr.mxu0 0.0
    %374 = vmatpush1.msra.mxu0 0.0
    %375 = vmatprep.subr.mxu0 0.0
    %376 = vmatpush1.msra.mxu0 0.0
    %377 = vmatprep.subr.mxu0 0.0
    %378 = vmatpush1.msra.mxu0 0.0
    %379 = vmatprep.subr.mxu0 0.0
    %380 = vmatpush1.msra.mxu0 0.0
    %381 = vmatprep.subr.mxu0 0.0
    %382 = vmatpush1.msra.mxu0 0.0
    %383 = vmatprep.subr.mxu0 0.0
    %384 = vmatpush1.msra.mxu0 0.0
    %385 = vmatprep.subr.mxu0 0.0
    %386 = vmatpush1.msra.mxu0 0.0
    %387 = vmatprep.subr.mxu0 0.0
    %388 = vmatpush1.msra.mxu0 0.0
    %389 = vmatprep.subr.mxu0 0.0
    %390 = vmatpush1.msra.mxu0 0.0
    %391 = vmatprep.subr.mxu0 0.0
    %392 = vmatpush1.msra.mxu0 0.0
    %393 = vmatprep.subr.mxu0 0.0
    %394 = vmatpush1.msra.mxu0 0.0
    %395 = vmatprep.subr.mxu0 0.0
    %396 = vmatpush1.msra.mxu0 0.0
    %397 = vmatprep.subr.mxu0 0.0
    %398 = vmatpush1.msra.mxu0 0.0
    %399 = vmatprep.subr.mxu0 0.0
    %400 = vmatpush1.msra.mxu0 0.0
    %401 = vmatprep.subr.mxu0 0.0
    %402 = vmatpush1.msra.mxu0 0.0
    %403 = vmatprep.subr.mxu0 0.0
    %404 = vmatpush1.msra.mxu0 0.0
    %405 = vmatprep.subr.mxu0 0.0
    %406 = vmatpush1.msra.mxu0 0.0
    %407 = vmatprep.subr.mxu0 0.0
    %408 = vmatpush1.msra.mxu0 0.0
    %409 = vmatprep.subr.mxu0 0.0
    %410 = vmatpush1.msra.mxu0 0.0
    %411 = vmatprep.subr.mxu0 0.0
    %412 = vmatpush1.msra.mxu0 0.0
    %413 = vmatprep.subr.mxu0 0.0
    %414 = vmatpush1.msra.mxu0 0.0
    %415 = vmatprep.subr.mxu0 0.0
    %416 = vmatpush1.msra.mxu0 0.0
    %417 = vmatprep.subr.mxu0 0.0
    %418 = vmatpush1.msra.mxu0 0.0
    %419 = vmatprep.subr.mxu0 0.0
    %420 = vmatpush1.msra.mxu0 0.0
    %421 = vmatprep.subr.mxu0 0.0
    %422 = vmatpush1.msra.mxu0 0.0
    %423 = vmatprep.subr.mxu0 0.0
    %424 = vmatpush1.msra.mxu0 0.0
    %425 = vmatprep.mubr.f32.mxu0 0.0
    %426 = vmatmul.mubr.f32.gmra.mrb[0].mxu0 %v359
    %v427 = vpop.f32.mrb[0].mxu0
    %v428 = vadd.f32 %v356, %v427
    %v429 = vpop.f32.mrb[0].mxu0
    %430 = vdwg.mxu0
    %v431 = vmax.f32 %v428, 0.0
    %v432 = vld [vmem:[%s11] sm:$0xff]
    %v433 = vld [vmem:[%s11 + $0x8] sm:$0xff]
    %v434 = vld [vmem:[%s11 + $0x10] sm:$0xff]
    %v435 = vld [vmem:[%s11 + $0x18] sm:$0xff]
    %v436 = vld [vmem:[#allocation2] sm:$0x1]
    %v438 = vlaneseq
    %v439 = vshrl.u32 %v438, 7
    %v440 = vsub.s32 0, %v439
    %v441 = vrot.slane %v436, %v440
    %v444 = vsel %vm187, %v431, 0
    %446 = vmatprep.subr.mxu0 0.0
    %447 = vmatpush1.msra.mxu0 %v432
    %448 = vmatprep.subr.mxu0 0.0
    %449 = vmatpush1.msra.mxu0 %v433
    %450 = vmatprep.subr.mxu0 0.0
    %451 = vmatpush1.msra.mxu0 %v434
    %452 = vmatprep.subr.mxu0 0.0
    %453 = vmatpush1.msra.mxu0 %v435
    %454 = vmatprep.subr.mxu0 0.0
    %455 = vmatpush1.msra.mxu0 0.0
    %456 = vmatprep.subr.mxu0 0.0
    %457 = vmatpush1.msra.mxu0 0.0
    %458 = vmatprep.subr.mxu0 0.0
    %459 = vmatpush1.msra.mxu0 0.0
    %460 = vmatprep.subr.mxu0 0.0
    %461 = vmatpush1.msra.mxu0 0.0
    %462 = vmatprep.subr.mxu0 0.0
    %463 = vmatpush1.msra.mxu0 0.0
    %464 = vmatprep.subr.mxu0 0.0
    %465 = vmatpush1.msra.mxu0 0.0
    %466 = vmatprep.subr.mxu0 0.0
    %467 = vmatpush1.msra.mxu0 0.0
    %468 = vmatprep.subr.mxu0 0.0
    %469 = vmatpush1.msra.mxu0 0.0
    %470 = vmatprep.subr.mxu0 0.0
    %471 = vmatpush1.msra.mxu0 0.0
    %472 = vmatprep.subr.mxu0 0.0
    %473 = vmatpush1.msra.mxu0 0.0
    %474 = vmatprep.subr.mxu0 0.0
    %475 = vmatpush1.msra.mxu0 0.0
    %476 = vmatprep.subr.mxu0 0.0
    %477 = vmatpush1.msra.mxu0 0.0
    %478 = vmatprep.subr.mxu0 0.0
    %479 = vmatpush1.msra.mxu0 0.0
    %480 = vmatprep.subr.mxu0 0.0
    %481 = vmatpush1.msra.mxu0 0.0
    %482 = vmatprep.subr.mxu0 0.0
    %483 = vmatpush1.msra.mxu0 0.0
    %484 = vmatprep.subr.mxu0 0.0
    %485 = vmatpush1.msra.mxu0 0.0
    %486 = vmatprep.subr.mxu0 0.0
    %487 = vmatpush1.msra.mxu0 0.0
    %488 = vmatprep.subr.mxu0 0.0
    %489 = vmatpush1.msra.mxu0 0.0
    %490 = vmatprep.subr.mxu0 0.0
    %491 = vmatpush1.msra.mxu0 0.0
    %492 = vmatprep.subr.mxu0 0.0
    %493 = vmatpush1.msra.mxu0 0.0
    %494 = vmatprep.subr.mxu0 0.0
    %495 = vmatpush1.msra.mxu0 0.0
    %496 = vmatprep.subr.mxu0 0.0
    %497 = vmatpush1.msra.mxu0 0.0
    %498 = vmatprep.subr.mxu0 0.0
    %499 = vmatpush1.msra.mxu0 0.0
    %500 = vmatprep.subr.mxu0 0.0
    %501 = vmatpush1.msra.mxu0 0.0
    %502 = vmatprep.subr.mxu0 0.0
    %503 = vmatpush1.msra.mxu0 0.0
    %504 = vmatprep.subr.mxu0 0.0
    %505 = vmatpush1.msra.mxu0 0.0
    %506 = vmatprep.subr.mxu0 0.0
    %507 = vmatpush1.msra.mxu0 0.0
    %508 = vmatprep.subr.mxu0 0.0
    %509 = vmatpush1.msra.mxu0 0.0
    %510 = vmatprep.mubr.f32.mxu0 0.0
    %511 = vmatmul.mubr.f32.gmra.mrb[0].mxu0 %v444
    %v512 = vpop.f32.mrb[0].mxu0
    %v513 = vadd.f32 %v441, %v512
    %v514 = vpop.f32.mrb[0].mxu0
    %515 = vdwg.mxu0
    %517 = vset.pattern.permute.xlu0 0
    %518 = vperm.xlu0 %517, %v513
    %v519 = vpop.permute.xlu0 %518
    %v520 = vlaneseq
    %v521 = vand.u32 %v520, 127
    %v522 = vlaneseq
    %v523 = vshrl.u32 %v522, 7
    %v524 = vsub.s32 %v521, %v523
    %v525 = vrot.slane %v519, %v524
    %vm527 = vcmask 57344
    %528 = vst.msk [vmem:[#allocation8] sm:$0x1] %vm527, %v525
    // Predicated region
    $region62: #{tpu_custom_call.1} parent=1 // pred_check
      _
    $region63: #{tpu_custom_call.1} parent=1 // pred_check_branch
      %530 = sbr.rel (0) target = $region65
    $region64: #{tpu_custom_call.1} parent=1 // pred_region
      %s532 = ssub.s32 16, 16
      %533 = vsyncadd [#allocation5], %s532
      %s535 = sshll.u32 [#allocation8], 4
      %s536 = int_to_ptr.vmem [resolvable:$true] %s535
      %538 = dma.vmem_to_hbm [thread:$0]  %s536, 16, %s13, [#allocation5]
    $region65: #{tpu_custom_call.1} parent=1 // pred_fallthru
      _
    // Predicated region
    $region66: #{tpu_custom_call.1} parent=1 // pred_check
      _
    $region67: #{tpu_custom_call.1} parent=1 // pred_check_branch
      %540 = sbr.rel (0) target = $region69
    $region68: #{tpu_custom_call.1} parent=1 // pred_region
      %541 = dma.done [#allocation5], 16
    $region69: #{tpu_custom_call.1} parent=1 // pred_fallthru
      _
    %542 = vsyncpa [#allocation4], 1
    %543 = vsyncpa [#allocation7], 1
    %544 = vsyncpa [#allocation5], 1

</llo_original>
